<compile_context>
chip_gen: v6e
topology: v6e:2x2x1
jax: 0.10.0
libtpu: 0.0.40
codegen_flags: <defaults>
</compile_context>

<pallas_src>
import functools

import jax
import jax.numpy as jnp
from jax.experimental import pallas as pl
from jax.experimental.pallas import tpu as pltpu


def _grad_depth_loss_kernel(pred_ref, gt_ref, out_ref, prev_pred_ref,
                            prev_gt_ref, *, h_total, valid_mask):
    hi = pl.program_id(1)
    th, w = pred_ref.shape
    tiled_h = th < h_total                       # static python bool

    pred = pred_ref[...].astype(jnp.float32)     # (TH, W), cast in VMEM
    gt = gt_ref[...].astype(jnp.float32)
    if valid_mask:
        gt = jnp.where(gt == 0.0, jnp.inf, gt)   # invalid (zero) depth -> +inf

    def mask_gt(d):                              # nan/inf gt gradients -> 0
        return jnp.where(jnp.isfinite(d), d, 0.0) if valid_mask else d

    # ---------- x (lane axis) gradient ----------
    if w % 128 == 0:
        # XLU roll keeps vregs 128-lane dense; mask off the wrap-around column.
        dpx = pltpu.roll(pred, shift=w - 1, axis=1) - pred   # rolled[i] = x[i+1]
        dgx = mask_gt(pltpu.roll(gt, shift=w - 1, axis=1) - gt)
        col = jax.lax.broadcasted_iota(jnp.int32, (th, w), 1)
        vx = col < (w - 1)
        if tiled_h:
            row = jax.lax.broadcasted_iota(jnp.int32, (th, w), 0)
            vx = vx & ((row + hi * th) < h_total)
        sum_x = jnp.sum(jnp.where(vx, jnp.abs(dpx - dgx), 0.0))
    else:
        # fallback for lane-unaligned widths
        dpx = pred[:, 1:] - pred[:, :-1]
        dgx = mask_gt(gt[:, 1:] - gt[:, :-1])
        ax = jnp.abs(dpx - dgx)
        if tiled_h:
            row = jax.lax.broadcasted_iota(jnp.int32, (th, w - 1), 0)
            ax = jnp.where((row + hi * th) < h_total, ax, 0.0)
        sum_x = jnp.sum(ax)

    # ---------- y (sublane axis) gradient inside this tile ----------
    if th % 8 == 0:
        dpy = pltpu.roll(pred, shift=th - 1, axis=0) - pred  # rolled[r] = x[r+1]
        dgy = mask_gt(pltpu.roll(gt, shift=th - 1, axis=0) - gt)
        rowy = jax.lax.broadcasted_iota(jnp.int32, (th, w), 0)
        vy = rowy < (th - 1)
        if tiled_h:
            vy = vy & ((rowy + hi * th) < (h_total - 1))
        sum_y = jnp.sum(jnp.where(vy, jnp.abs(dpy - dgy), 0.0))
    else:
        # only reachable for a single, sublane-unaligned H tile (th == H)
        dpy = pred[1:, :] - pred[:-1, :]
        dgy = mask_gt(gt[1:, :] - gt[:-1, :])
        sum_y = jnp.sum(jnp.abs(dpy - dgy))

    if tiled_h:
        # y-gradient pair straddling the tile boundary, using rows carried
        # from the previous H tile; only counted when hi > 0 (select guards
        # against the uninitialized scratch on the first tile of each image).
        bp = pred[0:1, :] - prev_pred_ref[...]
        bg = mask_gt(gt[0:1, :] - prev_gt_ref[...])
        bsum = jnp.sum(jnp.abs(bp - bg))
        sum_y = sum_y + jnp.where(hi > 0, bsum, 0.0)
        # carry the last (already zero->inf transformed) rows to the next tile
        prev_pred_ref[...] = pred[th - 1:th, :]
        prev_gt_ref[...] = gt[th - 1:th, :]

    # ---------- accumulate per-image partial sums (resident output block) ----
    srow = jax.lax.broadcasted_iota(jnp.int32, (1, 8, 128), 1)
    lane = jax.lax.broadcasted_iota(jnp.int32, (1, 8, 128), 2)
    contrib = (jnp.where((srow == 0) & (lane == 0), sum_x, 0.0) +
               jnp.where((srow == 0) & (lane == 1), sum_y, 0.0))
    if tiled_h:
        @pl.when(hi == 0)
        def _init():
            out_ref[...] = jnp.zeros_like(out_ref)

        out_ref[...] += contrib
    else:
        out_ref[...] = contrib


def _sublane_multiple(itemsize):
    # second-minor block granularity: 8 for f32, 16 for bf16/f16, 32 for 8-bit
    return max(8, 32 // max(1, int(itemsize)))


def _choose_tile_rows(h, w, itemsize, target_tile_bytes=1 << 20):
    """Rows per H tile (~1 MiB per input tile).  Keeps 2 inputs x 2 pipeline
    buffers plus the f32 working set inside the default scoped-VMEM limits of
    v5e (16 MiB) and v6e/v7x (32 MiB), well under v7x's 64 MiB physical VMEM."""
    sub = _sublane_multiple(itemsize)
    if h * w * itemsize <= target_tile_bytes or h <= sub:
        return int(h)
    rows = (target_tile_bytes // (w * itemsize)) // sub * sub
    rows = max(sub, int(rows))
    return int(h) if rows >= h else int(rows)


def grad_depth_loss(pred_depth, gt_depth, *, valid_mask=True, loss_weight=1.0,
                    tile_rows=None):
    """Pallas TPU implementation of GradDepthLoss.forward (debug=False).

    pred_depth, gt_depth: NCHW arrays of identical shape (any float dtype).
    Returns a float32 scalar.
    """
    # TODO(synk): debug=True branch (per-pixel |grad| maps) is not implemented.
    assert pred_depth.shape == gt_depth.shape
    n, c, h, w = pred_depth.shape
    assert h >= 2 and w >= 2, "spatial dims must be >= 2"
    b = n * c

    # Flatten batch/channel only; inputs travel over HBM in their native dtype
    # and are cast to f32 inside the kernel (halves HBM traffic for bf16/f16).
    pred3 = pred_depth.reshape(b, h, w)
    gt3 = gt_depth.reshape(b, h, w)

    max_item = max(pred3.dtype.itemsize, gt3.dtype.itemsize)
    sub = _sublane_multiple(min(pred3.dtype.itemsize, gt3.dtype.itemsize))
    if tile_rows is None:
        th = _choose_tile_rows(h, w, max_item)
    else:
        th = min(int(tile_rows), h)
        if th < h and th % sub != 0:
            raise ValueError(f"tile_rows must be a multiple of {sub} or >= H")
    n_h_tiles = int(pl.cdiv(h, th))

    kernel = functools.partial(_grad_depth_loss_kernel,
                               h_total=h, valid_mask=bool(valid_mask))

    total = b * h * w
    cost = pl.CostEstimate(
        flops=int(10 * total),
        transcendentals=0,
        bytes_accessed=int(total * (pred3.dtype.itemsize + gt3.dtype.itemsize)
                           + b * 8 * 128 * 4),
    )

    partial = pl.pallas_call(
        kernel,
        out_shape=jax.ShapeDtypeStruct((b, 8, 128), jnp.float32),
        grid_spec=pltpu.PrefetchScalarGridSpec(
            num_scalar_prefetch=0,
            grid=(b, n_h_tiles),
            in_specs=[
                pl.BlockSpec((None, th, w), lambda ib, ih: (ib, ih, 0)),
                pl.BlockSpec((None, th, w), lambda ib, ih: (ib, ih, 0)),
            ],
            out_specs=pl.BlockSpec((1, 8, 128), lambda ib, ih: (ib, 0, 0)),
            scratch_shapes=[
                pltpu.VMEM((1, w), jnp.float32),   # carried pred row
                pltpu.VMEM((1, w), jnp.float32),   # carried (transformed) gt row
            ],
        ),
        compiler_params=pltpu.CompilerParams(
            dimension_semantics=("parallel", "arbitrary")),
        cost_estimate=cost,
    )(pred3, gt3)

    # Tiny final reduction / scaling in XLA: better f32 accuracy and the
    # loss_weight / mean normalization is applied exactly once.
    sum_x = jnp.sum(partial[:, 0, 0])
    sum_y = jnp.sum(partial[:, 0, 1])
    count_x = float(b * h * (w - 1))
    count_y = float(b * (h - 1) * w)
    loss = loss_weight * (sum_x / count_x + sum_y / count_y)
    return loss.astype(jnp.float32)


def _grad_depth_loss_ref(pred_depth, gt_depth, *, valid_mask=True, loss_weight=1.0):
    """Pure-JAX reference mirroring the PyTorch code (for verification)."""
    pred = pred_depth.astype(jnp.float32)
    gt = gt_depth.astype(jnp.float32)
    if valid_mask:
        gt = jnp.where(gt == 0.0, jnp.inf, gt)
    pred_x = pred[:, :, :, 1:] - pred[:, :, :, :-1]
    pred_y = pred[:, :, 1:, :] - pred[:, :, :-1, :]
    gt_x = gt[:, :, :, 1:] - gt[:, :, :, :-1]
    gt_y = gt[:, :, 1:, :] - gt[:, :, :-1, :]
    if valid_mask:
        gt_x = jnp.where(jnp.isfinite(gt_x), gt_x, 0.0)
        gt_y = jnp.where(jnp.isfinite(gt_y), gt_y, 0.0)
    loss_x = jnp.mean(jnp.abs(pred_x - gt_x))
    loss_y = jnp.mean(jnp.abs(pred_y - gt_y))
    return loss_weight * (loss_x + loss_y)


if __name__ == "__main__":
    key = jax.random.PRNGKey(0)

    def make_inputs(shape, dtype, k):
        k1, k2, k3 = jax.random.split(k, 3)
        pred = jax.random.uniform(k1, shape, jnp.float32, 0.1, 10.0).astype(dtype)
        gt = jax.random.uniform(k2, shape, jnp.float32, 0.1, 10.0)
        zero_mask = jax.random.bernoulli(k3, 0.2, shape)    # invalid pixels
        gt = jnp.where(zero_mask, 0.0, gt).astype(dtype)
        return pred, gt

    cases = [
        # shape,            dtype,         valid_mask, loss_weight, tile_rows
        ((2, 1, 16, 128),   jnp.float32,   True,       1.0,         None),  # roll paths
        ((1, 2, 20, 128),   jnp.float32,   True,       0.5,         8),     # H-tiling + remainder + boundary
        ((1, 1, 32, 256),   jnp.bfloat16,  True,       1.0,         16),    # native bf16 + H-tiling
        ((2, 1, 12, 48),    jnp.float32,   False,      2.0,         None),  # unaligned fallback, no mask
    ]
    keys = jax.random.split(key, len(cases))

    for (shape, dtype, vm, lw, tr), k in zip(cases, keys):
        pred, gt = make_inputs(shape, dtype, k)
        got = grad_depth_loss(pred, gt, valid_mask=vm, loss_weight=lw, tile_rows=tr)
        got = jax.block_until_ready(got)
        ref = _grad_depth_loss_ref(pred, gt, valid_mask=vm, loss_weight=lw)
        assert jnp.allclose(got, ref, rtol=1e-4, atol=1e-5), (shape, dtype, got, ref)

    print("KERNEL_OK")
</pallas_src>

<mosaic_0001>
module attributes {stable_mosaic.version = 11 : i64} {
  func.func @_grad_depth_loss_kernel(%arg0: i32, %arg1: i32, %arg2: memref<1x16x128xf32, #tpu.memory_space<vmem>>, %arg3: memref<1x16x128xf32, #tpu.memory_space<vmem>>, %arg4: memref<1x8x128xf32, #tpu.memory_space<vmem>>, %arg5: memref<1x128xf32, #tpu.memory_space<vmem>>, %arg6: memref<1x128xf32, #tpu.memory_space<vmem>>) attributes {dimension_semantics = [#tpu.dimension_semantics<parallel>, #tpu.dimension_semantics<arbitrary>], iteration_bounds = array<i64: 2, 1>, scalar_prefetch = 0 : i64, scratch_operands = 2 : i64, tpu.core_type = #tpu.core_type<tc>, window_params = [{transform_indices = @transform_0, window_bounds = array<i64: 1, 16, 128>}, {transform_indices = @transform_1, window_bounds = array<i64: 1, 16, 128>}, {transform_indices = @transform_2, window_bounds = array<i64: 1, 8, 128>}]} {
    %c0 = arith.constant 0 : index
    %c0_0 = arith.constant 0 : index
    %c0_1 = arith.constant 0 : index
    %0 = vector.load %arg2[%c0, %c0_0, %c0_1] : memref<1x16x128xf32, #tpu.memory_space<vmem>>, vector<1x16x128xf32>
    %1 = vector.shape_cast %0 : vector<1x16x128xf32> to vector<16x128xf32>
    %c0_2 = arith.constant 0 : index
    %c0_3 = arith.constant 0 : index
    %c0_4 = arith.constant 0 : index
    %2 = vector.load %arg3[%c0_2, %c0_3, %c0_4] : memref<1x16x128xf32, #tpu.memory_space<vmem>>, vector<1x16x128xf32>
    %3 = vector.shape_cast %2 : vector<1x16x128xf32> to vector<16x128xf32>
    %cst = arith.constant 0.000000e+00 : f32
    %4 = vector.broadcast %cst : f32 to vector<16x128xf32>
    %5 = arith.cmpf oeq, %3, %4 : vector<16x128xf32>
    %cst_5 = arith.constant 0x7F800000 : f32
    %6 = vector.broadcast %cst_5 : f32 to vector<16x128xf32>
    %7 = arith.select %5, %6, %3 : vector<16x128xi1>, vector<16x128xf32>
    %c127_i32 = arith.constant 127 : i32
    %8 = tpu.dynamic_rotate %1 by %c127_i32 dim 1 : vector<16x128xf32>, i32 -> vector<16x128xf32>
    %9 = arith.subf %8, %1 : vector<16x128xf32>
    %c127_i32_6 = arith.constant 127 : i32
    %10 = tpu.dynamic_rotate %7 by %c127_i32_6 dim 1 : vector<16x128xf32>, i32 -> vector<16x128xf32>
    %11 = arith.subf %10, %7 : vector<16x128xf32>
    %12 = tpu.weird %11 : vector<16x128xf32> -> vector<16x128xi1>
    %cst_7 = arith.constant dense<true> : vector<16x128xi1>
    %13 = arith.xori %12, %cst_7 : vector<16x128xi1>
    %cst_8 = arith.constant 0.000000e+00 : f32
    %14 = vector.broadcast %cst_8 : f32 to vector<16x128xf32>
    %15 = arith.select %13, %11, %14 : vector<16x128xi1>, vector<16x128xf32>
    %16 = tpu.iota {dimensions = array<i32: 1>} : vector<16x128xi32>
    %c127_i32_9 = arith.constant 127 : i32
    %17 = vector.broadcast %c127_i32_9 : i32 to vector<16x128xi32>
    %18 = arith.cmpi slt, %16, %17 : vector<16x128xi32>
    %19 = arith.subf %9, %15 : vector<16x128xf32>
    %20 = math.absf %19 : vector<16x128xf32>
    %cst_10 = arith.constant 0.000000e+00 : f32
    %21 = vector.broadcast %cst_10 : f32 to vector<16x128xf32>
    %22 = arith.select %18, %20, %21 : vector<16x128xi1>, vector<16x128xf32>
    %23 = vector.shape_cast %22 : vector<16x128xf32> to vector<1x16x128xf32>
    %cst_11 = arith.constant dense<0.000000e+00> : vector<1xf32>
    %24 = vector.multi_reduction <add>, %23, %cst_11 [1, 2] : vector<1x16x128xf32> to vector<1xf32>
    %25 = vector.shape_cast %24 : vector<1xf32> to vector<1x1x1xf32>
    %26 = vector.extract %25[0, 0, 0] : f32 from vector<1x1x1xf32>
    %c15_i32 = arith.constant 15 : i32
    %27 = tpu.dynamic_rotate %1 by %c15_i32 dim 0 : vector<16x128xf32>, i32 -> vector<16x128xf32>
    %28 = arith.subf %27, %1 : vector<16x128xf32>
    %c15_i32_12 = arith.constant 15 : i32
    %29 = tpu.dynamic_rotate %7 by %c15_i32_12 dim 0 : vector<16x128xf32>, i32 -> vector<16x128xf32>
    %30 = arith.subf %29, %7 : vector<16x128xf32>
    %31 = tpu.weird %30 : vector<16x128xf32> -> vector<16x128xi1>
    %cst_13 = arith.constant dense<true> : vector<16x128xi1>
    %32 = arith.xori %31, %cst_13 : vector<16x128xi1>
    %cst_14 = arith.constant 0.000000e+00 : f32
    %33 = vector.broadcast %cst_14 : f32 to vector<16x128xf32>
    %34 = arith.select %32, %30, %33 : vector<16x128xi1>, vector<16x128xf32>
    %35 = tpu.iota {dimensions = array<i32: 0>} : vector<16x128xi32>
    %c15_i32_15 = arith.constant 15 : i32
    %36 = vector.broadcast %c15_i32_15 : i32 to vector<16x128xi32>
    %37 = arith.cmpi slt, %35, %36 : vector<16x128xi32>
    %38 = arith.subf %28, %34 : vector<16x128xf32>
    %39 = math.absf %38 : vector<16x128xf32>
    %cst_16 = arith.constant 0.000000e+00 : f32
    %40 = vector.broadcast %cst_16 : f32 to vector<16x128xf32>
    %41 = arith.select %37, %39, %40 : vector<16x128xi1>, vector<16x128xf32>
    %42 = vector.shape_cast %41 : vector<16x128xf32> to vector<1x16x128xf32>
    %cst_17 = arith.constant dense<0.000000e+00> : vector<1xf32>
    %43 = vector.multi_reduction <add>, %42, %cst_17 [1, 2] : vector<1x16x128xf32> to vector<1xf32>
    %44 = vector.shape_cast %43 : vector<1xf32> to vector<1x1x1xf32>
    %45 = vector.extract %44[0, 0, 0] : f32 from vector<1x1x1xf32>
    %46 = tpu.iota {dimensions = array<i32: 1>} : vector<1x8x128xi32>
    %47 = tpu.iota {dimensions = array<i32: 2>} : vector<1x8x128xi32>
    %c0_i32 = arith.constant 0 : i32
    %48 = vector.broadcast %c0_i32 : i32 to vector<1x8x128xi32>
    %49 = arith.cmpi eq, %46, %48 : vector<1x8x128xi32>
    %c0_i32_18 = arith.constant 0 : i32
    %50 = vector.broadcast %c0_i32_18 : i32 to vector<1x8x128xi32>
    %51 = arith.cmpi eq, %47, %50 : vector<1x8x128xi32>
    %52 = arith.andi %49, %51 : vector<1x8x128xi1>
    %cst_19 = arith.constant 0.000000e+00 : f32
    %53 = vector.broadcast %26 : f32 to vector<1x8x128xf32>
    %54 = vector.broadcast %cst_19 : f32 to vector<1x8x128xf32>
    %55 = arith.select %52, %53, %54 : vector<1x8x128xi1>, vector<1x8x128xf32>
    %c0_i32_20 = arith.constant 0 : i32
    %56 = vector.broadcast %c0_i32_20 : i32 to vector<1x8x128xi32>
    %57 = arith.cmpi eq, %46, %56 : vector<1x8x128xi32>
    %c1_i32 = arith.constant 1 : i32
    %58 = vector.broadcast %c1_i32 : i32 to vector<1x8x128xi32>
    %59 = arith.cmpi eq, %47, %58 : vector<1x8x128xi32>
    %60 = arith.andi %57, %59 : vector<1x8x128xi1>
    %cst_21 = arith.constant 0.000000e+00 : f32
    %61 = vector.broadcast %45 : f32 to vector<1x8x128xf32>
    %62 = vector.broadcast %cst_21 : f32 to vector<1x8x128xf32>
    %63 = arith.select %60, %61, %62 : vector<1x8x128xi1>, vector<1x8x128xf32>
    %64 = arith.addf %55, %63 : vector<1x8x128xf32>
    %c0_22 = arith.constant 0 : index
    %c0_23 = arith.constant 0 : index
    %c0_24 = arith.constant 0 : index
    %65 = vector.load %arg4[%c0_22, %c0_23, %c0_24] : memref<1x8x128xf32, #tpu.memory_space<vmem>>, vector<1x8x128xf32>
    tpu.vector_store %arg4[%c0_22, %c0_23, %c0_24], %64 {strides = array<i32>} : memref<1x8x128xf32, #tpu.memory_space<vmem>>, vector<1x8x128xf32>,
    return
  }
  func.func @transform_0(%arg0: i32, %arg1: i32) -> (i32, i32, i32) {
    %c0_i32 = arith.constant 0 : i32
    %c0_i32_0 = arith.constant 0 : i32
    return %arg0, %arg1, %c0_i32 : i32, i32, i32
  }
  func.func @transform_1(%arg0: i32, %arg1: i32) -> (i32, i32, i32) {
    %c0_i32 = arith.constant 0 : i32
    %c0_i32_0 = arith.constant 0 : i32
    return %arg0, %arg1, %c0_i32 : i32, i32, i32
  }
  func.func @transform_2(%arg0: i32, %arg1: i32) -> (i32, i32, i32) {
    %c0_i32 = arith.constant 0 : i32
    %c0_i32_0 = arith.constant 0 : i32
    %c0_i32_1 = arith.constant 0 : i32
    return %arg0, %c0_i32, %c0_i32_0 : i32, i32, i32
  }
}

</mosaic_0001>

<llo_original>
// kernel: tpu_custom_call.1
$region0: #{tpu_custom_call.1}
  #allocation0 [shape = 'u32[]', space=smem, size = 0x4, offset = 0x4, fixed_abs, tag = 'smem constant byte address 0x4 - core index']
  #allocation1 [shape = 'u32[144,128]{1,0:T(1,128)}', space=vmem, size = 0x12000, scoped, tag = 'internal scratch']
  #allocation2 [shape = 'f32[1,128]{1,0:T(1,128)}', space=vmem, size = 0x200, scoped, tag = 'scratch operand']
  #allocation3 [shape = 'f32[1,128]{1,0:T(1,128)}', space=vmem, size = 0x200, scoped, tag = 'scratch operand']
  %s0 = inlined_call_operand.hbm [shape: f32[2,16,128], index: 0, kind: input, shape index: {}]
  %s1 = inlined_call_operand.hbm [shape: f32[2,16,128], index: 1, kind: input, shape index: {}]
  %s2 = inlined_call_operand.hbm [shape: f32[2,8,128], index: 2, kind: output, shape index: {}]
  %s3 = sld [smem:[#allocation0]]
  $region49: #{tpu_custom_call.1} parent=0
    _
  %s5 = ssub.s32 1, %s3
  %s6 = scalar_select 0, %s5, %s3
  $region1: #{tpu_custom_call.1} parent=0
    #allocation4 [shape = 'u8[16384]{0}', space=vmem, size = 0x4000, scoped, tag = 'input window, operand 0']
    #allocation5 [shape = 's32[2]{0}', space=sflag, size = 0x8, scoped, tag = 'scoped memory for tpu_custom_call.1']
    #allocation6 [shape = 's32[2]{0}', space=sflag, size = 0x8, scoped, tag = 'scoped memory for tpu_custom_call.1']
    #allocation7 [shape = 'u8[16384]{0}', space=vmem, size = 0x4000, scoped, tag = 'input window, operand 1']
    #allocation8 [shape = 's32[2]{0}', space=sflag, size = 0x8, scoped, tag = 'scoped memory for tpu_custom_call.1']
    #allocation9 [shape = 'u8[8192]{0}', space=vmem, size = 0x2000, scoped, tag = 'output window, operand 0']
    %7 = vsyncpa [#allocation5], 0
    %s8 = scalar_lea.sflag [#allocation5], 1
    %9 = vsyncpa %s8, 0
    %10 = vsyncpa [#allocation8], 0
    %s11 = scalar_lea.sflag [#allocation8], 1
    %12 = vsyncpa %s11, 0
    %13 = vsyncpa [#allocation6], 0
    %s14 = scalar_lea.sflag [#allocation6], 1
    %15 = vsyncpa %s14, 0
    loop: start=0, step=1, limit=4
    $region2: #{tpu_custom_call.1} parent=1 // loop_pre_header
      _
    $region3: #{tpu_custom_call.1} parent=1 // loop_header
      %s17 = sphi 0, %s21
      %p18 = scmp.ge.s32.totalorder %s17, 4
      %s24 = sphi 0, %s36
      %s25 = sphi 0, %s32
      %s26 = sphi 0, %s24
      %s27 = sphi 0, %s25
      %s28 = sphi 0, %s26
      %s29 = sphi 0, %s27
      %s41 = sphi 0, %s43
      %s44 = sphi 0, %s41
      %s45 = sphi 0, %s44
      %s61 = sphi 0, %s45
      %s69 = sphi 0, %s71
      %s72 = sphi 0, %s69
      %s73 = sphi 0, %s72
      %s89 = sphi 0, %s73
      %s95 = sphi 0, %s97
      %s98 = sphi 0, %s95
      %s99 = sphi 0, %s98
      %s115 = sphi 0, %s99
    $region4: #{tpu_custom_call.1} parent=1 // loop_header_branch
      %20 = sbr.rel (%p18) target = $region8
    $region5: #{tpu_custom_call.1} parent=1 // loop_body
      %s22 = ssub.s32 %s17, 1
      %s23 = ssub.s32 %s17, 2
      %s30 = sadd.s32 1, %s25
      %p31 = scmp.ge.s32.totalorder %s30, 1
      %s32 = scalar_select %p31, 0, %s30
      %s33 = sadd.s32 1, %s24
      %s34 = scalar_select %p31, %s33, %s24
      %p35 = scmp.ge.s32.totalorder %s34, 2
      %s36 = scalar_select %p35, 0, %s34
      %s37 = ssub.s32 %s24, %s36
      %s38 = ssub.s32 %s25, %s32
      %s39 = sor.u32 %s37, %s38
      %p40 = scmp.eq.s32.totalorder %s39, 0
      %s42 = sadd.s32 %s41, 1
      %s43 = scalar_select %p40, %s41, %s42
      %p46 = pneg %p40
      %p47 = scmp.eq.s32.totalorder %s17, 1
      %p48 = por %p46, %p47
      %p49 = scmp.ne.s32.totalorder %s41, %s44
      %p50 = scmp.eq.s32.totalorder %s17, 0
      %p51 = por %p49, %p50
      %p52 = scmp.ne.s32.totalorder %s41, %s44
      %p53 = scmp.eq.s32.totalorder %s22, 1
      %p54 = por %p52, %p53
      %p55 = scmp.ne.s32.totalorder %s44, %s45
      %p56 = scmp.eq.s32.totalorder %s22, 0
      %p57 = por %p55, %p56
      %p58 = scmp.ne.s32.totalorder %s44, %s45
      %p59 = scmp.eq.s32.totalorder %s23, 1
      %p60 = por %p58, %p59
      %p62 = scmp.ne.s32.totalorder %s45, %s61
      %p63 = scmp.eq.s32.totalorder %s23, 0
      %p64 = por %p62, %p63
      %s65 = ssub.s32 %s24, %s36
      %s66 = ssub.s32 %s25, %s32
      %s67 = sor.u32 %s65, %s66
      %p68 = scmp.eq.s32.totalorder %s67, 0
      %s70 = sadd.s32 %s69, 1
      %s71 = scalar_select %p68, %s69, %s70
      %p74 = pneg %p68
      %p75 = scmp.eq.s32.totalorder %s17, 1
      %p76 = por %p74, %p75
      %p77 = scmp.ne.s32.totalorder %s69, %s72
      %p78 = scmp.eq.s32.totalorder %s17, 0
      %p79 = por %p77, %p78
      %p80 = scmp.ne.s32.totalorder %s69, %s72
      %p81 = scmp.eq.s32.totalorder %s22, 1
      %p82 = por %p80, %p81
      %p83 = scmp.ne.s32.totalorder %s72, %s73
      %p84 = scmp.eq.s32.totalorder %s22, 0
      %p85 = por %p83, %p84
      %p86 = scmp.ne.s32.totalorder %s72, %s73
      %p87 = scmp.eq.s32.totalorder %s23, 1
      %p88 = por %p86, %p87
      %p90 = scmp.ne.s32.totalorder %s73, %s89
      %p91 = scmp.eq.s32.totalorder %s23, 0
      %p92 = por %p90, %p91
      %s93 = ssub.s32 %s24, %s36
      %p94 = scmp.eq.s32.totalorder %s93, 0
      %s96 = sadd.s32 %s95, 1
      %s97 = scalar_select %p94, %s95, %s96
      %p100 = pneg %p94
      %p101 = scmp.eq.s32.totalorder %s17, 1
      %p102 = por %p100, %p101
      %p103 = scmp.ne.s32.totalorder %s95, %s98
      %p104 = scmp.eq.s32.totalorder %s17, 0
      %p105 = por %p103, %p104
      %p106 = scmp.ne.s32.totalorder %s95, %s98
      %p107 = scmp.eq.s32.totalorder %s22, 1
      %p108 = por %p106, %p107
      %p109 = scmp.ne.s32.totalorder %s98, %s99
      %p110 = scmp.eq.s32.totalorder %s22, 0
      %p111 = por %p109, %p110
      %p112 = scmp.ne.s32.totalorder %s98, %s99
      %p113 = scmp.eq.s32.totalorder %s23, 1
      %p114 = por %p112, %p113
      %p116 = scmp.ne.s32.totalorder %s99, %s115
      %p117 = scmp.eq.s32.totalorder %s23, 0
      %p118 = por %p116, %p117
      %p119 = scmp.le.s32.totalorder 1, %s17
      %p120 = scmp.lt.s32.totalorder %s17, 3
      %p121 = pnand %p119, %p120
      %p122 = pneg %p121
      // Predicated region
      $region9: #{tpu_custom_call.1} parent=5 // pred_check
        _
      $region10: #{tpu_custom_call.1} parent=5 // pred_check_branch
        %124 = sbr.rel (%p121) target = $region12
      $region11: #{tpu_custom_call.1} parent=5 // pred_region
        %s125 = ssub.s32 %s17, 1
      $region12: #{tpu_custom_call.1} parent=5 // pred_fallthru
        _
      %p126 = scmp.lt.s32.totalorder %s17, 2
      // Predicated region
      $region13: #{tpu_custom_call.1} parent=5 // pred_check
        %p127 = pneg %p126
      $region14: #{tpu_custom_call.1} parent=5 // pred_check_branch
        %129 = sbr.rel (%p127) target = $region16
      $region15: #{tpu_custom_call.1} parent=5 // pred_region
        // Predicated region
        $region17: #{tpu_custom_call.1} parent=15 // pred_check
          %p130 = pneg %p51
        $region18: #{tpu_custom_call.1} parent=15 // pred_check_branch
          %132 = sbr.rel (%p130) target = $region20
        $region19: #{tpu_custom_call.1} parent=15 // pred_region
          %s133 = sand.u32 %s41, 1
          %s134 = scalar_lea.sflag [#allocation5], %s133
          %s135 = sand.u32 %s41, 1
          %s136 = smul.addr %s135, 16
          %s137 = scalar_lea.vmem [#allocation4], %s136
          %s138 = smul.u32 2, %s25
          %s140 = ssub.s32 256, 256
          %141 = vsyncadd %s134, %s140
          %s142 = smul.addr %s24, 2
          %s143 = sadd.s32 %s138, %s142
          %s144 = smul.addr %s143, 128
          %s145 = scalar_lea.hbm %s0, %s144
          %s146 = sshll.u32 %s137, 4
          %s147 = int_to_ptr.vmem [resolvable:$true] %s146
          %152 = dma.hbm_to_vmem [thread:$0]  %s145, 256, %s147, %s134, 128, 128, 8
        $region20: #{tpu_custom_call.1} parent=15 // pred_fallthru
          _
        // Predicated region
        $region21: #{tpu_custom_call.1} parent=15 // pred_check
          %p153 = pneg %p79
        $region22: #{tpu_custom_call.1} parent=15 // pred_check_branch
          %155 = sbr.rel (%p153) target = $region24
        $region23: #{tpu_custom_call.1} parent=15 // pred_region
          %s156 = sand.u32 %s69, 1
          %s157 = scalar_lea.sflag [#allocation8], %s156
          %s158 = sand.u32 %s69, 1
          %s159 = smul.addr %s158, 16
          %s160 = scalar_lea.vmem [#allocation7], %s159
          %s161 = smul.u32 2, %s25
          %s163 = ssub.s32 256, 256
          %164 = vsyncadd %s157, %s163
          %s165 = smul.addr %s24, 2
          %s166 = sadd.s32 %s161, %s165
          %s167 = smul.addr %s166, 128
          %s168 = scalar_lea.hbm %s1, %s167
          %s169 = sshll.u32 %s160, 4
          %s170 = int_to_ptr.vmem [resolvable:$true] %s169
          %175 = dma.hbm_to_vmem [thread:$0]  %s168, 256, %s170, %s157, 128, 128, 8
        $region24: #{tpu_custom_call.1} parent=15 // pred_fallthru
          _
      $region16: #{tpu_custom_call.1} parent=5 // pred_fallthru
        _
      %p176 = scmp.le.s32.totalorder 1, %s17
      %p177 = scmp.lt.s32.totalorder %s17, 3
      %p178 = pnand %p176, %p177
      %p179 = pneg %p178
      // Predicated region
      $region25: #{tpu_custom_call.1} parent=5 // pred_check
        _
      $region26: #{tpu_custom_call.1} parent=5 // pred_check_branch
        %181 = sbr.rel (%p178) target = $region28
      $region27: #{tpu_custom_call.1} parent=5 // pred_region
        %s182 = ssub.s32 %s17, 1
        %s183 = sand.u32 %s44, 1
        %s184 = scalar_lea.sflag [#allocation5], %s183
        %s185 = sand.u32 %s44, 1
        %s186 = smul.addr %s185, 16
        %s187 = scalar_lea.vmem [#allocation4], %s186
        // Predicated region
        $region29: #{tpu_custom_call.1} parent=27 // pred_check
          %p188 = pneg %p57
        $region30: #{tpu_custom_call.1} parent=27 // pred_check_branch
          %190 = sbr.rel (%p188) target = $region32
        $region31: #{tpu_custom_call.1} parent=27 // pred_region
          %191 = dma.done %s184, 256
        $region32: #{tpu_custom_call.1} parent=27 // pred_fallthru
          _
        %s192 = sand.u32 %s72, 1
        %s193 = scalar_lea.sflag [#allocation8], %s192
        %s194 = sand.u32 %s72, 1
        %s195 = smul.addr %s194, 16
        %s196 = scalar_lea.vmem [#allocation7], %s195
        // Predicated region
        $region33: #{tpu_custom_call.1} parent=27 // pred_check
          %p197 = pneg %p85
        $region34: #{tpu_custom_call.1} parent=27 // pred_check_branch
          %199 = sbr.rel (%p197) target = $region36
        $region35: #{tpu_custom_call.1} parent=27 // pred_region
          %200 = dma.done %s193, 256
        $region36: #{tpu_custom_call.1} parent=27 // pred_fallthru
          _
        %s201 = sand.u32 %s44, 1
        %s202 = scalar_lea.sflag [#allocation5], %s201
        %s203 = sand.u32 %s44, 1
        %s204 = smul.addr %s203, 16
        %s205 = scalar_lea.vmem [#allocation4], %s204
        %p206 = pneg %p57
        %p207 = pneg %p54
        %s208 = sand.u32 %s72, 1
        %s209 = scalar_lea.sflag [#allocation8], %s208
        %s210 = sand.u32 %s72, 1
        %s211 = smul.addr %s210, 16
        %s212 = scalar_lea.vmem [#allocation7], %s211
        %p213 = pneg %p85
        %p214 = pneg %p82
        %p215 = pneg %p111
        %p216 = pneg %p108
        %s217 = sand.u32 %s98, 1
        %s218 = scalar_lea.sflag [#allocation6], %s217
        %s219 = sand.u32 %s98, 1
        %s220 = smul.addr %s219, 8
        %s221 = scalar_lea.vmem [#allocation9], %s220
        %s222 = smul.u32 2, %s27
        %s223 = smul.u32 2, %s27
        %v224 = vld [vmem:[%s187] sm:$0xff]
        %v225 = vld [vmem:[%s187 + $0x8] sm:$0xff]
        %v226 = vld [vmem:[%s196] sm:$0xff]
        %v227 = vld [vmem:[%s196 + $0x8] sm:$0xff]
        %vm228 = vcmp.eq.f32.partialorder %v226, 0.0
        %vm229 = vcmp.eq.f32.partialorder %v227, 0.0
        %v230 = vsel %vm228, inf, %v226
        %v231 = vsel %vm229, inf, %v227
        %232 = vrot.lane.b32.xlu0 %v224, 127
        %v233 = vpop.permute.xlu0 %232
        %234 = vrot.lane.b32.xlu0 %v225, 127
        %v235 = vpop.permute.xlu0 %234
        %v236 = vsub.f32 %v233, %v224
        %v237 = vsub.f32 %v235, %v225
        %238 = vrot.lane.b32.xlu0 %v230, 127
        %v239 = vpop.permute.xlu0 %238
        %240 = vrot.lane.b32.xlu0 %v231, 127
        %v241 = vpop.permute.xlu0 %240
        %v242 = vsub.f32 %v239, %v230
        %v243 = vsub.f32 %v241, %v231
        %vm244 = vweird.f32 %v242
        %vm245 = vweird.f32 %v243
        %vm246 = vmxor %vm244, 1
        %vm247 = vmxor %vm245, 1
        %v248 = vsel %vm246, %v242, 0.0
        %v249 = vsel %vm247, %v243, 0.0
        %v250 = vlaneseq
        %v251 = vand.u32 %v250, 127
        %vm252 = vcmp.lt.s32.totalorder %v251, 127
        %v253 = vsub.f32 %v236, %v248
        %v254 = vsub.f32 %v237, %v249
        %v255 = vand.u32 2147483647, %v253
        %v256 = vand.u32 2147483647, %v254
        %v257 = vsel %vm252, %v255, 0.0
        %v258 = vsel %vm252, %v256, 0.0
        %v259 = vadd.f32 %v257, %v258
        %260 = vadd.xlane.f32.xlu0 %v259
        %v261 = vpop.xlane.xlu0 %260
        %v262 = vrot.slane %v261, 4
        %v263 = vadd.f32 %v261, %v262
        %v264 = vrot.slane %v263, 2
        %v265 = vadd.f32 %v263, %v264
        %v266 = vrot.slane %v265, 1
        %v267 = vadd.f32 %v265, %v266
        %s268 = vtos %v267
        %v269 = vrot.slane %v224, 1
        %v270 = vrot.slane %v225, 1
        %v271 = vlaneseq
        %v272 = vshrl.u32 %v271, 7
        %vm273 = vcmp.lt.s32.totalorder %v272, 7
        %v274 = vsel %vm273, %v269, %v270
        %v275 = vsel %vm273, %v270, %v269
        %v276 = vsub.f32 %v274, %v224
        %v277 = vsub.f32 %v275, %v225
        %v278 = vrot.slane %v230, 1
        %v279 = vrot.slane %v231, 1
        %v280 = vsel %vm273, %v278, %v279
        %v281 = vsel %vm273, %v279, %v278
        %v282 = vsub.f32 %v280, %v230
        %v283 = vsub.f32 %v281, %v231
        %vm284 = vweird.f32 %v282
        %vm285 = vweird.f32 %v283
        %vm286 = vmxor %vm284, 1
        %vm287 = vmxor %vm285, 1
        %v288 = vsel %vm286, %v282, 0.0
        %v289 = vsel %vm287, %v283, 0.0
        %v290 = vadd.s32 %v272, 8
        %vm291 = vcmp.lt.s32.totalorder %v272, 15
        %vm292 = vcmp.lt.s32.totalorder %v290, 15
        %v293 = vsub.f32 %v276, %v288
        %v294 = vsub.f32 %v277, %v289
        %v295 = vand.u32 2147483647, %v293
        %v296 = vand.u32 2147483647, %v294
        %v297 = vsel %vm291, %v295, 0.0
        %v298 = vsel %vm292, %v296, 0.0
        %v299 = vadd.f32 %v297, %v298
        %300 = vadd.xlane.f32.xlu0 %v299
        %v301 = vpop.xlane.xlu0 %300
        %v302 = vrot.slane %v301, 4
        %v303 = vadd.f32 %v301, %v302
        %v304 = vrot.slane %v303, 2
        %v305 = vadd.f32 %v303, %v304
        %v306 = vrot.slane %v305, 1
        %v307 = vadd.f32 %v305, %v306
        %s308 = vtos %v307
        %vm309 = vcmp.eq.s32.totalorder %v272, 0
        %vm310 = vcmp.eq.s32.totalorder %v251, 0
        %vm311 = vmand %vm309, %vm310
        %v312 = vstv %s268
        %v313 = vsel %vm311, %v312, 0.0
        %vm314 = vcmp.eq.s32.totalorder %v251, 1
        %vm315 = vmand %vm309, %vm314
        %v316 = vstv %s308
        %v317 = vsel %vm315, %v316, 0.0
        %v318 = vadd.f32 %v313, %v317
        %319 = vst [vmem:[%s221] sm:$0xff] %v318
        %s320 = sand.u32 %s98, 1
        %s321 = scalar_lea.sflag [#allocation6], %s320
        %s322 = sand.u32 %s98, 1
        %s323 = smul.addr %s322, 8
        %s324 = scalar_lea.vmem [#allocation9], %s323
        // Predicated region
        $region37: #{tpu_custom_call.1} parent=27 // pred_check
          %p325 = pneg %p108
        $region38: #{tpu_custom_call.1} parent=27 // pred_check_branch
          %327 = sbr.rel (%p325) target = $region40
        $region39: #{tpu_custom_call.1} parent=27 // pred_region
          %s329 = ssub.s32 128, 128
          %330 = vsyncadd %s321, %s329
          %s331 = smul.addr %s26, 128
          %s332 = scalar_lea.hbm %s2, %s331
          %s334 = sshll.u32 %s324, 4
          %s335 = int_to_ptr.vmem [resolvable:$true] %s334
          %337 = dma.vmem_to_hbm [thread:$0]  %s335, 128, %s332, %s321
        $region40: #{tpu_custom_call.1} parent=27 // pred_fallthru
          _
      $region28: #{tpu_custom_call.1} parent=5 // pred_fallthru
        _
      %p338 = scmp.le.s32.totalorder 2, %s17
      // Predicated region
      $region41: #{tpu_custom_call.1} parent=5 // pred_check
        %p339 = pneg %p338
      $region42: #{tpu_custom_call.1} parent=5 // pred_check_branch
        %341 = sbr.rel (%p339) target = $region44
      $region43: #{tpu_custom_call.1} parent=5 // pred_region
        %s342 = ssub.s32 %s17, 2
        // Predicated region
        $region45: #{tpu_custom_call.1} parent=43 // pred_check
          %p343 = pneg %p114
        $region46: #{tpu_custom_call.1} parent=43 // pred_check_branch
          %345 = sbr.rel (%p343) target = $region48
        $region47: #{tpu_custom_call.1} parent=43 // pred_region
          %s346 = sand.u32 %s99, 1
          %s347 = scalar_lea.sflag [#allocation6], %s346
          %s348 = sand.u32 %s99, 1
          %s349 = smul.addr %s348, 8
          %s350 = scalar_lea.vmem [#allocation9], %s349
          %351 = dma.done %s347, 128
        $region48: #{tpu_custom_call.1} parent=43 // pred_fallthru
          _
      $region44: #{tpu_custom_call.1} parent=5 // pred_fallthru
        _
    $region6: #{tpu_custom_call.1} parent=1 // loop_footer
      %s21 = sadd.s32 1, %s17
    $region7: #{tpu_custom_call.1} parent=1 // loop_footer_branch
      %16 = sbr.rel target = $region3
    $region8: #{tpu_custom_call.1} parent=1 // loop_exit
      _
    %352 = vsyncpa [#allocation5], 1
    %s353 = scalar_lea.sflag [#allocation5], 1
    %354 = vsyncpa %s353, 1
    %355 = vsyncpa [#allocation8], 1
    %s356 = scalar_lea.sflag [#allocation8], 1
    %357 = vsyncpa %s356, 1
    %358 = vsyncpa [#allocation6], 1
    %s359 = scalar_lea.sflag [#allocation6], 1
    %360 = vsyncpa %s359, 1

</llo_original>
